<compile_context>
chip_gen: v5e
topology: v5e:2x2
jax: 0.10.0
libtpu: 0.0.40
codegen_flags: <defaults>
</compile_context>

<pallas_src>
import numpy as np
import jax
import jax.numpy as jnp
from jax.experimental import pallas as pl
from jax.experimental.pallas import tpu as pltpu

_LIM_VAL = 36.0
_EPS = float(np.finfo(np.float64).resolution)  # 1e-15 (no-op at f32, matches torch-f32)

_TILE_ELEMS = 512 * 1024  # ~2 MiB of f32 per grid step


def _logexp(t):
    """Matches the PyTorch `logexp` (a clamped softplus + eps)."""
    return _EPS + jnp.where(
        t > _LIM_VAL,
        t,
        jnp.log(jnp.exp(jnp.clip(t, -_LIM_VAL, _LIM_VAL)) + 1.0),
    )


def _tanh_warp_kernel(params_ref, y_ref, o_ref):
    # params_ref lives in SMEM: [a, b, c] already post-logexp (hoisted to wrapper).
    a = params_ref[0]
    b = params_ref[1]
    c = params_ref[2]
    x = y_ref[...].astype(jnp.float32)  # single up-cast per tile for bf16/fp16 inputs
    o_ref[...] = (a * jnp.tanh(b * (x + c))).astype(o_ref.dtype)


def _choose_layout(total, itemsize):
    """Pick (lanes, rows, row_tile, padded_total) for a lane-dense 2D view."""
    lanes = None
    for cand in (2048, 1024, 512, 256, 128):
        if total % cand == 0:
            lanes = cand
            break
    if lanes is None:        # ragged (total not a multiple of 128): rare fallback
        lanes = 128
    padded = -(-total // lanes) * lanes
    rows = padded // lanes

    # ~2 MiB f32 per tile; every candidate value is a multiple of 8.
    max_rows = max(_TILE_ELEMS // lanes, 8)

    # v7x has 2 TensorCores: for big inputs make sure the "parallel" grid axis
    # has >= 2 steps so both cores get work (harmless on v5e/v6e).
    if total * itemsize >= (1 << 20) and rows >= 16:
        half = ((rows + 1) // 2 + 7) // 8 * 8
        max_rows = min(max_rows, max(half, 8))

    # row_tile is either the full extent (tiny inputs) or a multiple of 8,
    # satisfying the (8, 128) block-shape constraint; ragged edge blocks along
    # the grid axis are handled by Pallas (masked writeback).
    row_tile = rows if rows <= max_rows else max_rows
    return lanes, rows, row_tile, padded


def tanh_single_warping_forward(y, pre_a, pre_b, c):
    """Applies a * tanh(b * (y + c)) elementwise, a = logexp(pre_a), b = logexp(pre_b)."""
    orig_shape = y.shape
    orig_dtype = y.dtype
    total = int(np.prod(orig_shape)) if orig_shape else 1
    if total == 0:
        return y

    # Hoist the scalar softplus out of the kernel (keeps the EUP free for tanh).
    params = jnp.stack(
        [
            _logexp(jnp.asarray(pre_a, jnp.float32).reshape(())),
            _logexp(jnp.asarray(pre_b, jnp.float32).reshape(())),
            jnp.asarray(c, jnp.float32).reshape(()),
        ]
    )

    itemsize = jnp.dtype(orig_dtype).itemsize
    lanes, rows, row_tile, padded = _choose_layout(total, itemsize)

    flat = y.reshape(-1)                       # pure bitcast for contiguous inputs
    needs_pad = padded != total
    if needs_pad:
        # Only hit when total is not a multiple of 128 (small, gated pad).
        flat = jnp.pad(flat, (0, padded - total))
    y2 = flat.reshape(rows, lanes)

    grid = (pl.cdiv(rows, row_tile),)

    out2 = pl.pallas_call(
        _tanh_warp_kernel,
        out_shape=jax.ShapeDtypeStruct((rows, lanes), orig_dtype),
        grid_spec=pl.GridSpec(
            grid=grid,
            in_specs=[
                pl.BlockSpec(memory_space=pltpu.MemorySpace.SMEM),  # [a, b, c]
                pl.BlockSpec((row_tile, lanes), lambda i: (i, 0)),  # data tile
            ],
            out_specs=pl.BlockSpec((row_tile, lanes), lambda i: (i, 0)),
        ),
        compiler_params=pltpu.CompilerParams(
            dimension_semantics=("parallel",),
            vmem_limit_bytes=32 * 1024 * 1024,  # headroom; >= default on all gens
        ),
        cost_estimate=pl.CostEstimate(
            flops=3 * total,
            transcendentals=total,
            bytes_accessed=2 * total * itemsize,
        ),
    )(params, y2)

    if needs_pad:
        return out2.reshape(-1)[:total].reshape(orig_shape)
    return out2.reshape(orig_shape)


def _reference_forward(y, pre_a, pre_b, c):
    a = _logexp(jnp.asarray(pre_a, jnp.float32))
    b = _logexp(jnp.asarray(pre_b, jnp.float32))
    return a * jnp.tanh(b * (y + jnp.asarray(c, jnp.float32)))


# TODO(synk): jacobian() (a*b*sech^2) and the Sech custom autograd backward are
# not part of the forward pass and are not implemented as Pallas kernels.

if __name__ == "__main__":
    key = jax.random.PRNGKey(0)
    k_y, k_a, k_b, k_c = jax.random.split(key, 4)

    # Deterministic parameter init mirroring reset_parameters():
    #   pre_a, pre_b ~ |N(0, 1)|,   c ~ U(-0.5, 0.5)
    pre_a = jnp.abs(jax.random.normal(k_a, (), dtype=jnp.float32))
    pre_b = jnp.abs(jax.random.normal(k_b, (), dtype=jnp.float32))
    c = jax.random.uniform(k_c, (), dtype=jnp.float32, minval=-0.5, maxval=0.5)

    # Small NCHW input.
    y = jax.random.normal(k_y, (2, 4, 16, 16), dtype=jnp.float32)

    out = tanh_single_warping_forward(y, pre_a, pre_b, c)
    out = jax.block_until_ready(out)

    ref = _reference_forward(y, pre_a, pre_b, c)
    np.testing.assert_allclose(np.asarray(out), np.asarray(ref), rtol=1e-6, atol=1e-6)

    print("KERNEL_OK")
</pallas_src>

<mosaic_0001>
module attributes {stable_mosaic.version = 11 : i64} {
  func.func @_tanh_warp_kernel(%arg0: i32, %arg1: memref<3xf32, #tpu.memory_space<smem>>, %arg2: memref<1x2048xf32, #tpu.memory_space<vmem>>, %arg3: memref<1x2048xf32, #tpu.memory_space<vmem>>) attributes {dimension_semantics = [#tpu.dimension_semantics<parallel>], iteration_bounds = array<i64: 1>, scalar_prefetch = 0 : i64, scratch_operands = 0 : i64, tpu.core_type = #tpu.core_type<tc>, window_params = [{transform_indices = @transform_0, window_bounds = array<i64: 3>}, {transform_indices = @transform_1, window_bounds = array<i64: 1, 2048>}, {transform_indices = @transform_2, window_bounds = array<i64: 1, 2048>}]} {
    %c0 = arith.constant 0 : index
    %0 = memref.load %arg1[%c0] : memref<3xf32, #tpu.memory_space<smem>>
    %c1 = arith.constant 1 : index
    %1 = memref.load %arg1[%c1] : memref<3xf32, #tpu.memory_space<smem>>
    %c2 = arith.constant 2 : index
    %2 = memref.load %arg1[%c2] : memref<3xf32, #tpu.memory_space<smem>>
    %c0_0 = arith.constant 0 : index
    %c0_1 = arith.constant 0 : index
    %3 = vector.load %arg2[%c0_0, %c0_1] : memref<1x2048xf32, #tpu.memory_space<vmem>>, vector<1x2048xf32>
    %4 = vector.broadcast %2 : f32 to vector<1x2048xf32>
    %5 = arith.addf %3, %4 : vector<1x2048xf32>
    %6 = vector.broadcast %1 : f32 to vector<1x2048xf32>
    %7 = arith.mulf %6, %5 : vector<1x2048xf32>
    %8 = math.tanh %7 : vector<1x2048xf32>
    %9 = vector.broadcast %0 : f32 to vector<1x2048xf32>
    %10 = arith.mulf %9, %8 : vector<1x2048xf32>
    %c0_2 = arith.constant 0 : index
    %c0_3 = arith.constant 0 : index
    %11 = vector.load %arg3[%c0_2, %c0_3] : memref<1x2048xf32, #tpu.memory_space<vmem>>, vector<1x2048xf32>
    tpu.vector_store %arg3[%c0_2, %c0_3], %10 {strides = array<i32>} : memref<1x2048xf32, #tpu.memory_space<vmem>>, vector<1x2048xf32>,
    return
  }
  func.func @transform_0(%arg0: i32) -> i32 {
    %c0_i32 = arith.constant 0 : i32
    %c0_i32_0 = arith.constant 0 : i32
    return %c0_i32 : i32
  }
  func.func @transform_1(%arg0: i32) -> (i32, i32) {
    %c0_i32 = arith.constant 0 : i32
    %c0_i32_0 = arith.constant 0 : i32
    return %arg0, %c0_i32 : i32, i32
  }
  func.func @transform_2(%arg0: i32) -> (i32, i32) {
    %c0_i32 = arith.constant 0 : i32
    %c0_i32_0 = arith.constant 0 : i32
    return %arg0, %c0_i32 : i32, i32
  }
}

</mosaic_0001>

<llo_original>
// kernel: tpu_custom_call.1
$region0: #{tpu_custom_call.1}
  #allocation0 [shape = 'u32[]', space=smem, size = 0x4, offset = 0x4, fixed_abs, tag = 'smem constant byte address 0x4 - core index']
  #allocation1 [shape = 'u32[72,128]{1,0:T(1,128)}', space=vmem, size = 0x9000, scoped, tag = 'internal scratch']
  %s0 = inlined_call_operand.hbm [shape: f32[3], index: 0, kind: input, shape index: {}]
  %s1 = inlined_call_operand.hbm [shape: f32[1,2048], index: 1, kind: input, shape index: {}]
  %s2 = inlined_call_operand.hbm [shape: f32[1,2048], index: 2, kind: output, shape index: {}]
  %s3 = sld [smem:[#allocation0]]
  $region26: #{tpu_custom_call.1} parent=0
    _
  %s5 = ssub.s32 1, %s3
  %s6 = scalar_select 0, %s5, %s3
  $region1: #{tpu_custom_call.1} parent=0
    #allocation2 [shape = 'u8[512]{0}', space=smem, size = 0x200, scoped, tag = 'input window, operand 0, single buffered']
    #allocation3 [shape = 's32[1]{0}', space=sflag, size = 0x4, scoped, tag = 'scoped memory for tpu_custom_call.1']
    #allocation4 [shape = 's32[1]{0}', space=sflag, size = 0x4, scoped, tag = 'scoped memory for tpu_custom_call.1']
    #allocation5 [shape = 's32[1]{0}', space=sflag, size = 0x4, scoped, tag = 'scoped memory for tpu_custom_call.1']
    #allocation6 [shape = 'u8[8192]{0}', space=vmem, size = 0x2000, scoped, tag = 'input window, operand 1, single buffered']
    #allocation7 [shape = 'u8[8192]{0}', space=vmem, size = 0x2000, scoped, tag = 'output window, operand 0, single buffered']
    %7 = vsyncpa [#allocation5], 0
    %8 = vsyncpa [#allocation3], 0
    %9 = vsyncpa [#allocation4], 0
    // Predicated region
    $region2: #{tpu_custom_call.1} parent=1 // pred_check
      _
    $region3: #{tpu_custom_call.1} parent=1 // pred_check_branch
      %11 = sbr.rel (0) target = $region5
    $region4: #{tpu_custom_call.1} parent=1 // pred_region
      %13 = vsyncadd [#allocation5], 0
      %s15 = sshll.u32 %s0, 4
      %s16 = int_to_ptr.hbm [resolvable:$true] %s15
      %18 = dma.hbm_to_smem %s16, 16, [#allocation2], [#allocation5]
    $region5: #{tpu_custom_call.1} parent=1 // pred_fallthru
      _
    // Predicated region
    $region6: #{tpu_custom_call.1} parent=1 // pred_check
      _
    $region7: #{tpu_custom_call.1} parent=1 // pred_check_branch
      %20 = sbr.rel (0) target = $region9
    $region8: #{tpu_custom_call.1} parent=1 // pred_region
      %22 = vsyncadd [#allocation3], 0
      %s24 = sshll.u32 %s1, 4
      %s25 = int_to_ptr.hbm [resolvable:$true] %s24
      %s26 = sshll.u32 [#allocation6], 4
      %s27 = int_to_ptr.vmem [resolvable:$true] %s26
      %29 = dma.hbm_to_vmem [thread:$0]  %s25, 256, %s27, [#allocation3]
    $region9: #{tpu_custom_call.1} parent=1 // pred_fallthru
      _
    // Predicated region
    $region10: #{tpu_custom_call.1} parent=1 // pred_check
      _
    $region11: #{tpu_custom_call.1} parent=1 // pred_check_branch
      %31 = sbr.rel (0) target = $region13
    $region12: #{tpu_custom_call.1} parent=1 // pred_region
      %33 = dma.done [#allocation5], 16
    $region13: #{tpu_custom_call.1} parent=1 // pred_fallthru
      _
    // Predicated region
    $region14: #{tpu_custom_call.1} parent=1 // pred_check
      _
    $region15: #{tpu_custom_call.1} parent=1 // pred_check_branch
      %35 = sbr.rel (0) target = $region17
    $region16: #{tpu_custom_call.1} parent=1 // pred_region
      %37 = dma.done [#allocation3], 256
    $region17: #{tpu_custom_call.1} parent=1 // pred_fallthru
      _
    %38 = sfence
    %s39 = sld [smem:[#allocation2]]
    %s40 = sld [smem:[#allocation2 + $0x1]]
    %s41 = sld [smem:[#allocation2 + $0x2]]
    %v42 = vld [vmem:[#allocation6] sm:$0xff]
    %v43 = vld [vmem:[#allocation6 + $0x8] sm:$0xff]
    %v44 = vstv %s41
    %v45 = vadd.f32 %v42, %v44
    %v46 = vadd.f32 %v43, %v44
    %v47 = vstv %s40
    %v48 = vmul.f32 %v47, %v45
    %v49 = vmul.f32 %v47, %v46
    %v50 = vtanh.pop %v48
    %v51 = vtanh.pop %v49
    %v52 = vstv %s39
    %v53 = vmul.f32 %v52, %v50
    %v54 = vmul.f32 %v52, %v51
    %55 = vst [vmem:[#allocation7] sm:$0xff] %v53
    %56 = vst [vmem:[#allocation7 + $0x8] sm:$0xff] %v54
    // Predicated region
    $region18: #{tpu_custom_call.1} parent=1 // pred_check
      _
    $region19: #{tpu_custom_call.1} parent=1 // pred_check_branch
      %58 = sbr.rel (0) target = $region21
    $region20: #{tpu_custom_call.1} parent=1 // pred_region
      %60 = vsyncadd [#allocation4], 0
      %s62 = sshll.u32 [#allocation7], 4
      %s63 = int_to_ptr.vmem [resolvable:$true] %s62
      %s64 = sshll.u32 %s2, 4
      %s65 = int_to_ptr.hbm [resolvable:$true] %s64
      %67 = dma.vmem_to_hbm [thread:$0]  %s63, 256, %s65, [#allocation4]
    $region21: #{tpu_custom_call.1} parent=1 // pred_fallthru
      _
    // Predicated region
    $region22: #{tpu_custom_call.1} parent=1 // pred_check
      _
    $region23: #{tpu_custom_call.1} parent=1 // pred_check_branch
      %69 = sbr.rel (0) target = $region25
    $region24: #{tpu_custom_call.1} parent=1 // pred_region
      %71 = dma.done [#allocation4], 256
    $region25: #{tpu_custom_call.1} parent=1 // pred_fallthru
      _
    %72 = vsyncpa [#allocation3], 1
    %73 = vsyncpa [#allocation4], 1
    %74 = vsyncpa [#allocation5], 1

</llo_original>
